<compile_context>
chip_gen: v6e
topology: v6e:2x2x1
jax: 0.10.0
libtpu: 0.0.40
codegen_flags: <defaults>
</compile_context>

<pallas_src>
import functools
from random import random, seed

import jax
import jax.numpy as jnp
from jax.experimental import pallas as pl
from jax.experimental.pallas import tpu as pltpu

BN_EPS = 1e-5
LANE = 128


def _round_up(n, m):
    return ((n + m - 1) // m) * m


def _pad2(a, rows, cols, dtype):
    a = a.astype(dtype)
    return jnp.pad(a, ((0, rows - a.shape[0]), (0, cols - a.shape[1])))


def predictor_kernel(x_ref, w1_ref, gamma_ref, beta_ref, w2_ref, o_ref, acc_ref):
    k = pl.program_id(0)

    @pl.when(k == 0)
    def _():
        acc_ref[...] = jnp.zeros_like(acc_ref)

    # ---- Linear 1 (MXU, bf16 operands, f32 accumulation). Bias b1 intentionally omitted:
    # training-mode BatchNorm subtracts the batch mean, which cancels any per-feature
    # constant exactly and leaves the batch variance unchanged.
    h = jnp.dot(x_ref[...], w1_ref[...], preferred_element_type=jnp.float32)  # (B, tile_mid) f32

    # ---- BatchNorm1d (training mode, biased batch variance), fused scale/shift ----
    mean = jnp.mean(h, axis=0, keepdims=True)                                  # (1, tile_mid)
    var = jnp.mean(jnp.square(h - mean), axis=0, keepdims=True)                # biased variance
    scale = gamma_ref[...] * jax.lax.rsqrt(var + BN_EPS)                       # (1, tile_mid)
    shift = beta_ref[...] - mean * scale
    h_bn = h * scale + shift                                                   # one FMA pass

    # ---- GELU (exact, erf-based — matches nn.GELU default) ----
    g = 0.5 * h_bn * (1.0 + jax.lax.erf(h_bn * 0.7071067811865476))

    # ---- Linear 2 (no bias): accumulate over d_mid tiles into the f32 scratch ----
    acc_ref[...] += jnp.dot(g.astype(jnp.bfloat16), w2_ref[...],
                            preferred_element_type=jnp.float32)

    @pl.when(k == pl.num_programs(0) - 1)
    def _():
        o_ref[...] = acc_ref[...]


@functools.partial(jax.jit, static_argnames=("tile_mid",))
def predictor_forward(x, w1, b1, gamma, beta, w2, *, tile_mid=128):
    del b1  # cancelled exactly by train-mode BN mean subtraction (see kernel comment)

    B, d_in = x.shape
    d_mid = w1.shape[1]
    d_out = w2.shape[1]

    assert tile_mid % LANE == 0
    d_in_p = _round_up(d_in, LANE)
    d_mid_p = _round_up(d_mid, tile_mid)
    d_out_p = _round_up(d_out, LANE)
    n_k = d_mid_p // tile_mid

    # Zero-padding is exact: padded x cols / W1 rows contribute 0 to h; padded W1 cols give
    # all-zero h columns whose gamma/beta are padded to 0 => h_bn = 0 => gelu(0) = 0; padded W2
    # rows/cols contribute 0 to the output, and padded output columns are sliced off below.
    x_p = _pad2(x, B, d_in_p, jnp.bfloat16)
    w1_p = _pad2(w1, d_in_p, d_mid_p, jnp.bfloat16)
    gamma_p = _pad2(gamma, 1, d_mid_p, jnp.float32)
    beta_p = _pad2(beta, 1, d_mid_p, jnp.float32)
    w2_p = _pad2(w2, d_mid_p, d_out_p, jnp.bfloat16)

    out_p = pl.pallas_call(
        predictor_kernel,
        out_shape=jax.ShapeDtypeStruct((B, d_out_p), jnp.float32),
        grid_spec=pltpu.PrefetchScalarGridSpec(
            num_scalar_prefetch=0,
            grid=(n_k,),
            in_specs=[
                pl.BlockSpec((B, d_in_p), lambda k: (0, 0)),         # x: resident across k
                pl.BlockSpec((d_in_p, tile_mid), lambda k: (0, k)),  # W1 column tile
                pl.BlockSpec((1, tile_mid), lambda k: (0, k)),       # gamma tile
                pl.BlockSpec((1, tile_mid), lambda k: (0, k)),       # beta tile
                pl.BlockSpec((tile_mid, d_out_p), lambda k: (k, 0)), # W2 row tile
            ],
            out_specs=pl.BlockSpec((B, d_out_p), lambda k: (0, 0)),  # resident output target
            scratch_shapes=[pltpu.VMEM((B, d_out_p), jnp.float32)],  # f32 accumulator
        ),
        compiler_params=pltpu.CompilerParams(
            dimension_semantics=("arbitrary",),        # d_mid is a reduction axis
            vmem_limit_bytes=32 * 1024 * 1024,
        ),
    )(x_p, w1_p, gamma_p, beta_p, w2_p)

    return out_p[:, :d_out]


class RandomApply:
    """Mirror of the PyTorch module: host-side Bernoulli gate around fn."""
    # TODO(synk): the Python `random()` gate is host-side control flow (as in PyTorch) and has
    # no in-kernel Pallas equivalent; it stays outside pallas_call by design.

    def __init__(self, fn, p):
        self.fn = fn
        self.p = p

    def __call__(self, x):
        if random() > self.p:
            return x
        return self.fn(x)


def reference_forward(x, w1, b1, gamma, beta, w2):
    h = x @ w1 + b1
    mean = jnp.mean(h, axis=0, keepdims=True)
    var = jnp.mean((h - mean) ** 2, axis=0, keepdims=True)
    h = (h - mean) / jnp.sqrt(var + BN_EPS) * gamma + beta
    g = jax.nn.gelu(h, approximate=False)
    return g @ w2


if __name__ == "__main__":
    seed(0)  # deterministic host-side gate for the RandomApply branch

    B, d_in, mult, d_out = 8, 16, 2, 8
    d_mid = d_in * mult

    key = jax.random.PRNGKey(0)
    kx, k1, kb1, kg, kb, k2 = jax.random.split(key, 6)

    x = jax.random.normal(kx, (B, d_in), dtype=jnp.float32)
    # parameters stored pre-transposed: (in_features, out_features)
    w1 = jax.random.normal(k1, (d_in, d_mid), dtype=jnp.float32) * (1.0 / jnp.sqrt(d_in))
    b1 = jax.random.normal(kb1, (1, d_mid), dtype=jnp.float32) * 0.1
    gamma = 1.0 + 0.1 * jax.random.normal(kg, (1, d_mid), dtype=jnp.float32)
    beta = 0.1 * jax.random.normal(kb, (1, d_mid), dtype=jnp.float32)
    w2 = jax.random.normal(k2, (d_mid, d_out), dtype=jnp.float32) * (1.0 / jnp.sqrt(d_mid))

    predictor = functools.partial(predictor_forward, w1=w1, b1=b1,
                                  gamma=gamma, beta=beta, w2=w2)

    # Identity branch (p=0.0: random() > 0 -> return x untouched)
    never = RandomApply(predictor, p=0.0)
    ident = never(x)
    assert ident is x

    # Applied branch (p=1.0: random() in [0,1) is never > 1.0 -> fn always applied)
    always = RandomApply(predictor, p=1.0)
    out = jax.block_until_ready(always(x))

    ref = reference_forward(x, w1, b1, gamma, beta, w2)
    assert out.shape == (B, d_out)
    # bf16 MXU operands with f32 accumulation -> relaxed tolerance vs f32 reference
    assert jnp.allclose(out, ref, atol=7e-2, rtol=7e-2), "mismatch vs JAX reference"

    print("KERNEL_OK")
</pallas_src>

<mosaic_0001>
module attributes {stable_mosaic.version = 11 : i64} {
  func.func @predictor_kernel(%arg0: i32, %arg1: memref<8x128xbf16, #tpu.memory_space<vmem>>, %arg2: memref<128x128xbf16, #tpu.memory_space<vmem>>, %arg3: memref<1x128xf32, #tpu.memory_space<vmem>>, %arg4: memref<1x128xf32, #tpu.memory_space<vmem>>, %arg5: memref<128x128xbf16, #tpu.memory_space<vmem>>, %arg6: memref<8x128xf32, #tpu.memory_space<vmem>>, %arg7: memref<8x128xf32, #tpu.memory_space<vmem>>) attributes {dimension_semantics = [#tpu.dimension_semantics<arbitrary>], iteration_bounds = array<i64: 1>, scalar_prefetch = 0 : i64, scratch_operands = 1 : i64, tpu.core_type = #tpu.core_type<tc>, window_params = [{pipeline_mode = #tpu.pipeline_mode<synchronous>, transform_indices = @transform_0, window_bounds = array<i64: 8, 128>}, {transform_indices = @transform_1, window_bounds = array<i64: 128, 128>}, {transform_indices = @transform_2, window_bounds = array<i64: 1, 128>}, {transform_indices = @transform_3, window_bounds = array<i64: 1, 128>}, {transform_indices = @transform_4, window_bounds = array<i64: 128, 128>}, {pipeline_mode = #tpu.pipeline_mode<synchronous>, transform_indices = @transform_5, window_bounds = array<i64: 8, 128>}]} {
    %c0_i32 = arith.constant 0 : i32
    %0 = arith.cmpi eq, %arg0, %c0_i32 : i32
    %1 = arith.extui %0 : i1 to i32
    %c0_i32_0 = arith.constant 0 : i32
    %2 = arith.cmpi ne, %1, %c0_i32_0 : i32
    scf.if %2 {
      %cst_25 = arith.constant 0.000000e+00 : f32
      %46 = vector.broadcast %cst_25 : f32 to vector<8x128xf32>
      %c0_26 = arith.constant 0 : index
      %c0_27 = arith.constant 0 : index
      %47 = vector.load %arg7[%c0_26, %c0_27] : memref<8x128xf32, #tpu.memory_space<vmem>>, vector<8x128xf32>
      tpu.vector_store %arg7[%c0_26, %c0_27], %46 {strides = array<i32>} : memref<8x128xf32, #tpu.memory_space<vmem>>, vector<8x128xf32>,
    } else {
    }
    %c0 = arith.constant 0 : index
    %c0_1 = arith.constant 0 : index
    %3 = vector.load %arg1[%c0, %c0_1] : memref<8x128xbf16, #tpu.memory_space<vmem>>, vector<8x128xbf16>
    %c0_2 = arith.constant 0 : index
    %c0_3 = arith.constant 0 : index
    %4 = vector.load %arg2[%c0_2, %c0_3] : memref<128x128xbf16, #tpu.memory_space<vmem>>, vector<128x128xbf16>
    %cst = arith.constant dense<0.000000e+00> : vector<8x128xf32>
    %5 = tpu.matmul %3, %4, %cst {dimension_numbers = #tpu.dot_dimension_numbers<[1], [0], [0], [1], [0, 0, 1, 1], [], []>} : vector<8x128xbf16>, vector<128x128xbf16>, vector<8x128xf32> -> vector<8x128xf32>
    %cst_4 = arith.constant dense<0.000000e+00> : vector<128xf32>
    %6 = vector.multi_reduction <add>, %5, %cst_4 [0] : vector<8x128xf32> to vector<128xf32>
    %7 = vector.shape_cast %6 : vector<128xf32> to vector<1x128xf32>
    %cst_5 = arith.constant 8.000000e+00 : f32
    %8 = vector.broadcast %cst_5 : f32 to vector<1x128xf32>
    %9 = arith.divf %7, %8 : vector<1x128xf32>
    %10 = vector.broadcast %9 : vector<1x128xf32> to vector<8x128xf32>
    %11 = arith.subf %5, %10 : vector<8x128xf32>
    %12 = arith.mulf %11, %11 : vector<8x128xf32>
    %cst_6 = arith.constant dense<0.000000e+00> : vector<128xf32>
    %13 = vector.multi_reduction <add>, %12, %cst_6 [0] : vector<8x128xf32> to vector<128xf32>
    %14 = vector.shape_cast %13 : vector<128xf32> to vector<1x128xf32>
    %cst_7 = arith.constant 8.000000e+00 : f32
    %15 = vector.broadcast %cst_7 : f32 to vector<1x128xf32>
    %16 = arith.divf %14, %15 : vector<1x128xf32>
    %c0_8 = arith.constant 0 : index
    %c0_9 = arith.constant 0 : index
    %17 = vector.load %arg3[%c0_8, %c0_9] : memref<1x128xf32, #tpu.memory_space<vmem>>, vector<1x128xf32>
    %cst_10 = arith.constant 9.99999974E-6 : f32
    %18 = vector.broadcast %cst_10 : f32 to vector<1x128xf32>
    %19 = arith.addf %16, %18 : vector<1x128xf32>
    %20 = math.rsqrt %19 : vector<1x128xf32>
    %21 = arith.mulf %17, %20 : vector<1x128xf32>
    %c0_11 = arith.constant 0 : index
    %c0_12 = arith.constant 0 : index
    %22 = vector.load %arg4[%c0_11, %c0_12] : memref<1x128xf32, #tpu.memory_space<vmem>>, vector<1x128xf32>
    %23 = arith.mulf %9, %21 : vector<1x128xf32>
    %24 = arith.subf %22, %23 : vector<1x128xf32>
    %25 = vector.broadcast %21 : vector<1x128xf32> to vector<8x128xf32>
    %26 = arith.mulf %5, %25 : vector<8x128xf32>
    %27 = vector.broadcast %24 : vector<1x128xf32> to vector<8x128xf32>
    %28 = arith.addf %26, %27 : vector<8x128xf32>
    %cst_13 = arith.constant 5.000000e-01 : f32
    %29 = vector.broadcast %cst_13 : f32 to vector<8x128xf32>
    %30 = arith.mulf %29, %28 : vector<8x128xf32>
    %cst_14 = arith.constant 0.707106769 : f32
    %31 = vector.broadcast %cst_14 : f32 to vector<8x128xf32>
    %32 = arith.mulf %28, %31 : vector<8x128xf32>
    %33 = math.erf %32 : vector<8x128xf32>
    %cst_15 = arith.constant 1.000000e+00 : f32
    %34 = vector.broadcast %cst_15 : f32 to vector<8x128xf32>
    %35 = arith.addf %34, %33 : vector<8x128xf32>
    %36 = arith.mulf %30, %35 : vector<8x128xf32>
    %c0_16 = arith.constant 0 : index
    %c0_17 = arith.constant 0 : index
    %37 = vector.load %arg7[%c0_16, %c0_17] : memref<8x128xf32, #tpu.memory_space<vmem>>, vector<8x128xf32>
    %38 = arith.truncf %36 : vector<8x128xf32> to vector<8x128xbf16>
    %c0_18 = arith.constant 0 : index
    %c0_19 = arith.constant 0 : index
    %39 = vector.load %arg5[%c0_18, %c0_19] : memref<128x128xbf16, #tpu.memory_space<vmem>>, vector<128x128xbf16>
    %cst_20 = arith.constant dense<0.000000e+00> : vector<8x128xf32>
    %40 = tpu.matmul %38, %39, %cst_20 {dimension_numbers = #tpu.dot_dimension_numbers<[1], [0], [0], [1], [0, 0, 1, 1], [], []>} : vector<8x128xbf16>, vector<128x128xbf16>, vector<8x128xf32> -> vector<8x128xf32>
    %41 = arith.addf %37, %40 : vector<8x128xf32>
    %c0_21 = arith.constant 0 : index
    %c0_22 = arith.constant 0 : index
    %42 = vector.load %arg7[%c0_21, %c0_22] : memref<8x128xf32, #tpu.memory_space<vmem>>, vector<8x128xf32>
    tpu.vector_store %arg7[%c0_21, %c0_22], %41 {strides = array<i32>} : memref<8x128xf32, #tpu.memory_space<vmem>>, vector<8x128xf32>,
    %c0_i32_23 = arith.constant 0 : i32
    %43 = arith.cmpi eq, %arg0, %c0_i32_23 : i32
    %44 = arith.extui %43 : i1 to i32
    %c0_i32_24 = arith.constant 0 : i32
    %45 = arith.cmpi ne, %44, %c0_i32_24 : i32
    scf.if %45 {
      %c0_25 = arith.constant 0 : index
      %c0_26 = arith.constant 0 : index
      %46 = vector.load %arg7[%c0_25, %c0_26] : memref<8x128xf32, #tpu.memory_space<vmem>>, vector<8x128xf32>
      %c0_27 = arith.constant 0 : index
      %c0_28 = arith.constant 0 : index
      %47 = vector.load %arg6[%c0_27, %c0_28] : memref<8x128xf32, #tpu.memory_space<vmem>>, vector<8x128xf32>
      tpu.vector_store %arg6[%c0_27, %c0_28], %46 {strides = array<i32>} : memref<8x128xf32, #tpu.memory_space<vmem>>, vector<8x128xf32>,
    } else {
    }
    return
  }
  func.func @transform_0(%arg0: i32) -> (i32, i32) {
    %c0_i32 = arith.constant 0 : i32
    %c0_i32_0 = arith.constant 0 : i32
    %c0_i32_1 = arith.constant 0 : i32
    return %c0_i32, %c0_i32_0 : i32, i32
  }
  func.func @transform_1(%arg0: i32) -> (i32, i32) {
    %c0_i32 = arith.constant 0 : i32
    %c0_i32_0 = arith.constant 0 : i32
    return %c0_i32, %arg0 : i32, i32
  }
  func.func @transform_2(%arg0: i32) -> (i32, i32) {
    %c0_i32 = arith.constant 0 : i32
    %c0_i32_0 = arith.constant 0 : i32
    return %c0_i32, %arg0 : i32, i32
  }
  func.func @transform_3(%arg0: i32) -> (i32, i32) {
    %c0_i32 = arith.constant 0 : i32
    %c0_i32_0 = arith.constant 0 : i32
    return %c0_i32, %arg0 : i32, i32
  }
  func.func @transform_4(%arg0: i32) -> (i32, i32) {
    %c0_i32 = arith.constant 0 : i32
    %c0_i32_0 = arith.constant 0 : i32
    return %arg0, %c0_i32 : i32, i32
  }
  func.func @transform_5(%arg0: i32) -> (i32, i32) {
    %c0_i32 = arith.constant 0 : i32
    %c0_i32_0 = arith.constant 0 : i32
    %c0_i32_1 = arith.constant 0 : i32
    return %c0_i32, %c0_i32_0 : i32, i32
  }
}

</mosaic_0001>

<llo_original>
// kernel: predictor_forward.1
$region0: #{predictor_forward.1}
  #allocation0 [shape = 'u32[]', space=smem, size = 0x4, offset = 0x4, fixed_abs, tag = 'smem constant byte address 0x4 - core index']
  #allocation1 [shape = 'u32[144,128]{1,0:T(1,128)}', space=vmem, size = 0x12000, scoped, tag = 'internal scratch']
  #allocation2 [shape = 'f32[8,128]{1,0:T(8,128)}', space=vmem, size = 0x1000, scoped, tag = 'scratch operand']
  %s0 = inlined_call_operand.vmem [shape: bf16[8,128], index: 0, kind: input, shape index: {}]
  %s1 = inlined_call_operand.vmem [shape: bf16[128,128], index: 1, kind: input, shape index: {}]
  %s2 = inlined_call_operand.vmem [shape: f32[1,128], index: 2, kind: input, shape index: {}]
  %s3 = inlined_call_operand.vmem [shape: f32[1,128], index: 3, kind: input, shape index: {}]
  %s4 = inlined_call_operand.vmem [shape: bf16[128,128], index: 4, kind: input, shape index: {}]
  %s5 = inlined_call_operand.hbm [shape: f32[8,128], index: 5, kind: output, shape index: {}]
  %s6 = sld [smem:[#allocation0]]
  $region38: #{predictor_forward.1} parent=0
    _
  %s8 = ssub.s32 1, %s6
  %s9 = scalar_select 0, %s8, %s6
  $region1: #{predictor_forward.1} parent=0
    #allocation3 [shape = 'u8[4096]{0}', space=vmem, size = 0x1000, scoped, tag = 'output window, operand 0, single buffered']
    #allocation4 [shape = 's32[1]{0}', space=sflag, size = 0x4, scoped, tag = 'scoped memory for predictor_forward.1']
    %10 = vsyncpa [#allocation4], 0
    // Predicated region
    $region2: #{predictor_forward.1} parent=1 // pred_check
      _
    $region3: #{predictor_forward.1} parent=1 // pred_check_branch
      %12 = sbr.rel (0) target = $region5
    $region4: #{predictor_forward.1} parent=1 // pred_region
      _
    $region5: #{predictor_forward.1} parent=1 // pred_fallthru
      _
    // Predicated region
    $region6: #{predictor_forward.1} parent=1 // pred_check
      _
    $region7: #{predictor_forward.1} parent=1 // pred_check_branch
      %14 = sbr.rel (0) target = $region9
    $region8: #{predictor_forward.1} parent=1 // pred_region
      _
    $region9: #{predictor_forward.1} parent=1 // pred_fallthru
      _
    // Predicated region
    $region10: #{predictor_forward.1} parent=1 // pred_check
      _
    $region11: #{predictor_forward.1} parent=1 // pred_check_branch
      %16 = sbr.rel (0) target = $region13
    $region12: #{predictor_forward.1} parent=1 // pred_region
      _
    $region13: #{predictor_forward.1} parent=1 // pred_fallthru
      _
    // Predicated region
    $region14: #{predictor_forward.1} parent=1 // pred_check
      _
    $region15: #{predictor_forward.1} parent=1 // pred_check_branch
      %18 = sbr.rel (0) target = $region17
    $region16: #{predictor_forward.1} parent=1 // pred_region
      _
    $region17: #{predictor_forward.1} parent=1 // pred_fallthru
      _
    // Predicated region
    $region18: #{predictor_forward.1} parent=1 // pred_check
      _
    $region19: #{predictor_forward.1} parent=1 // pred_check_branch
      %20 = sbr.rel (0) target = $region21
    $region20: #{predictor_forward.1} parent=1 // pred_region
      _
    $region21: #{predictor_forward.1} parent=1 // pred_fallthru
      _
    %p22 = scmp.eq.s32.totalorder 0, 0
    // Predicated region
    $region22: #{predictor_forward.1} parent=1 // pred_check
      %p23 = pneg %p22
    $region23: #{predictor_forward.1} parent=1 // pred_check_branch
      %25 = sbr.rel (%p23) target = $region25
    $region24: #{predictor_forward.1} parent=1 // pred_region
      %26 = vst [vmem:[#allocation2] sm:$0xff] 0.0
    $region25: #{predictor_forward.1} parent=1 // pred_fallthru
      _
    %v27 = vld [vmem:[%s0] sm:$0xf]
    %v28 = vld [vmem:[%s1] sm:$0xf]
    %v29 = vld [vmem:[%s1 + $0x4] sm:$0xf]
    %v30 = vld [vmem:[%s1 + $0x8] sm:$0xf]
    %v31 = vld [vmem:[%s1 + $0xc] sm:$0xf]
    %v32 = vld [vmem:[%s1 + $0x10] sm:$0xf]
    %v33 = vld [vmem:[%s1 + $0x14] sm:$0xf]
    %v34 = vld [vmem:[%s1 + $0x18] sm:$0xf]
    %v35 = vld [vmem:[%s1 + $0x1c] sm:$0xf]
    %v36 = vld [vmem:[%s1 + $0x20] sm:$0xf]
    %v37 = vld [vmem:[%s1 + $0x24] sm:$0xf]
    %v38 = vld [vmem:[%s1 + $0x28] sm:$0xf]
    %v39 = vld [vmem:[%s1 + $0x2c] sm:$0xf]
    %v40 = vld [vmem:[%s1 + $0x30] sm:$0xf]
    %v41 = vld [vmem:[%s1 + $0x34] sm:$0xf]
    %v42 = vld [vmem:[%s1 + $0x38] sm:$0xf]
    %v43 = vld [vmem:[%s1 + $0x3c] sm:$0xf]
    %v60 = vunpack.c.l.b16 %v28
    %v61 = vunpack.c.l.b16 %v29
    %v62 = vunpack.c.l.b16 %v30
    %v63 = vunpack.c.l.b16 %v31
    %v64 = vunpack.c.l.b16 %v32
    %v65 = vunpack.c.l.b16 %v33
    %v66 = vunpack.c.l.b16 %v34
    %v67 = vunpack.c.l.b16 %v35
    %v68 = vunpack.c.l.b16 %v36
    %v69 = vunpack.c.l.b16 %v37
    %v70 = vunpack.c.l.b16 %v38
    %v71 = vunpack.c.l.b16 %v39
    %v72 = vunpack.c.l.b16 %v40
    %v73 = vunpack.c.l.b16 %v41
    %v74 = vunpack.c.l.b16 %v42
    %v75 = vunpack.c.l.b16 %v43
    %v76 = vpack.c.b16 %v61, %v60
    %v77 = vpack.c.b16 %v63, %v62
    %v78 = vpack.c.b16 %v65, %v64
    %v79 = vpack.c.b16 %v67, %v66
    %v80 = vpack.c.b16 %v69, %v68
    %v81 = vpack.c.b16 %v71, %v70
    %v82 = vpack.c.b16 %v73, %v72
    %v83 = vpack.c.b16 %v75, %v74
    %92 = vmatprep.subr.bf16.mxu0 0
    %93 = vmatpush1.bf16.msra.mxu0 %v83
    %94 = vmatprep.subr.bf16.mxu0 0
    %95 = vmatpush1.bf16.msra.mxu0 %v82
    %96 = vmatprep.subr.bf16.mxu0 0
    %97 = vmatpush1.bf16.msra.mxu0 %v81
    %98 = vmatprep.subr.bf16.mxu0 0
    %99 = vmatpush1.bf16.msra.mxu0 %v80
    %100 = vmatprep.subr.bf16.mxu0 0
    %101 = vmatpush1.bf16.msra.mxu0 %v79
    %102 = vmatprep.subr.bf16.mxu0 0
    %103 = vmatpush1.bf16.msra.mxu0 %v78
    %104 = vmatprep.subr.bf16.mxu0 0
    %105 = vmatpush1.bf16.msra.mxu0 %v77
    %106 = vmatprep.subr.bf16.mxu0 0
    %107 = vmatpush1.bf16.msra.mxu0 %v76
    %108 = vmatprep.subr.bf16.mxu0 0
    %109 = vmatpush2.bf16.msra.mxu0 0
    %110 = vmatprep.subr.bf16.mxu0 0
    %111 = vmatpush2.bf16.msra.mxu0 0
    %112 = vmatprep.subr.bf16.mxu0 0
    %113 = vmatpush2.bf16.msra.mxu0 0
    %114 = vmatprep.subr.bf16.mxu0 0
    %115 = vmatpush2.bf16.msra.mxu0 0
    %116 = vmatprep.subr.bf16.mxu0 0
    %117 = vmatpush2.bf16.msra.mxu0 0
    %118 = vmatprep.subr.bf16.mxu0 0
    %119 = vmatpush2.bf16.msra.mxu0 0
    %120 = vmatprep.subr.bf16.mxu0 0
    %121 = vmatpush2.bf16.msra.mxu0 0
    %122 = vmatprep.subr.bf16.mxu0 0
    %123 = vmatpush2.bf16.msra.mxu0 0
    %124 = vmatprep.mubr.bf16.mxu0 0
    %125 = vmatmul.mubr.bf16.gmra.mxu0 %v27
    %v126 = vpop.f32.mrf.mxu0
    %v127 = vadd.f32 0.0, %v126
    %v128 = vpop.f32.mrf.mxu0
    %v129 = vpop.f32.mrf.mxu0
    %v130 = vpop.f32.mrf.mxu0
    %131 = vdwg.mxu0
    %v132 = vrot.slane %v127, 4
    %v133 = vadd.f32 %v127, %v132
    %v134 = vrot.slane %v133, 2
    %v135 = vadd.f32 %v133, %v134
    %v136 = vrot.slane %v135, 1
    %v137 = vadd.f32 %v135, %v136
    %v138 = vrcp.pop 8.0
    %v139 = vmul.f32 %v137, %v138
    %v140 = vsub.f32 %v127, %v139
    %v141 = vmul.f32 %v140, %v140
    %v142 = vrot.slane %v141, 4
    %v143 = vadd.f32 %v141, %v142
    %v144 = vrot.slane %v143, 2
    %v145 = vadd.f32 %v143, %v144
    %v146 = vrot.slane %v145, 1
    %v147 = vadd.f32 %v145, %v146
    %v148 = vmul.f32 %v147, %v138
    %v149 = vld [vmem:[%s2] sm:$0x1]
    %v150 = vadd.f32 %v148, 1e-05
    %v151 = vrsqrt.pop %v150
    %v152 = vmul.f32 %v149, %v151
    %v153 = vld [vmem:[%s3] sm:$0x1]
    %v154 = vmul.f32 %v139, %v152
    %v155 = vsub.f32 %v153, %v154
    %v157 = vlaneseq
    %v158 = vshrl.u32 %v157, 7
    %v159 = vsub.s32 0, %v158
    %v160 = vrot.slane %v152, %v159
    %v162 = vmul.f32 %v127, %v160
    %v164 = vlaneseq
    %v165 = vshrl.u32 %v164, 7
    %v166 = vsub.s32 0, %v165
    %v167 = vrot.slane %v155, %v166
    %v169 = vadd.f32 %v162, %v167
    %v170 = vmul.f32 %v169, 0.5
    %v171 = vmul.f32 %v169, 0.70710677
    %v172 = verf.f32.pop %v171
    %v173 = vadd.f32 %v172, 1.0
    %v174 = vmul.f32 %v170, %v173
    %v175 = vld [vmem:[#allocation2] sm:$0xff]
    %v176 = vpack.c.bf16 %v174, %v174
    %v177 = vld [vmem:[%s4] sm:$0xf]
    %v178 = vld [vmem:[%s4 + $0x4] sm:$0xf]
    %v179 = vld [vmem:[%s4 + $0x8] sm:$0xf]
    %v180 = vld [vmem:[%s4 + $0xc] sm:$0xf]
    %v181 = vld [vmem:[%s4 + $0x10] sm:$0xf]
    %v182 = vld [vmem:[%s4 + $0x14] sm:$0xf]
    %v183 = vld [vmem:[%s4 + $0x18] sm:$0xf]
    %v184 = vld [vmem:[%s4 + $0x1c] sm:$0xf]
    %v185 = vld [vmem:[%s4 + $0x20] sm:$0xf]
    %v186 = vld [vmem:[%s4 + $0x24] sm:$0xf]
    %v187 = vld [vmem:[%s4 + $0x28] sm:$0xf]
    %v188 = vld [vmem:[%s4 + $0x2c] sm:$0xf]
    %v189 = vld [vmem:[%s4 + $0x30] sm:$0xf]
    %v190 = vld [vmem:[%s4 + $0x34] sm:$0xf]
    %v191 = vld [vmem:[%s4 + $0x38] sm:$0xf]
    %v192 = vld [vmem:[%s4 + $0x3c] sm:$0xf]
    %v209 = vunpack.c.l.b16 %v177
    %v210 = vunpack.c.l.b16 %v178
    %v211 = vunpack.c.l.b16 %v179
    %v212 = vunpack.c.l.b16 %v180
    %v213 = vunpack.c.l.b16 %v181
    %v214 = vunpack.c.l.b16 %v182
    %v215 = vunpack.c.l.b16 %v183
    %v216 = vunpack.c.l.b16 %v184
    %v217 = vunpack.c.l.b16 %v185
    %v218 = vunpack.c.l.b16 %v186
    %v219 = vunpack.c.l.b16 %v187
    %v220 = vunpack.c.l.b16 %v188
    %v221 = vunpack.c.l.b16 %v189
    %v222 = vunpack.c.l.b16 %v190
    %v223 = vunpack.c.l.b16 %v191
    %v224 = vunpack.c.l.b16 %v192
    %v225 = vpack.c.b16 %v210, %v209
    %v226 = vpack.c.b16 %v212, %v211
    %v227 = vpack.c.b16 %v214, %v213
    %v228 = vpack.c.b16 %v216, %v215
    %v229 = vpack.c.b16 %v218, %v217
    %v230 = vpack.c.b16 %v220, %v219
    %v231 = vpack.c.b16 %v222, %v221
    %v232 = vpack.c.b16 %v224, %v223
    %241 = vmatprep.subr.bf16.mxu0 0
    %242 = vmatpush1.bf16.msra.mxu0 %v232
    %243 = vmatprep.subr.bf16.mxu0 0
    %244 = vmatpush1.bf16.msra.mxu0 %v231
    %245 = vmatprep.subr.bf16.mxu0 0
    %246 = vmatpush1.bf16.msra.mxu0 %v230
    %247 = vmatprep.subr.bf16.mxu0 0
    %248 = vmatpush1.bf16.msra.mxu0 %v229
    %249 = vmatprep.subr.bf16.mxu0 0
    %250 = vmatpush1.bf16.msra.mxu0 %v228
    %251 = vmatprep.subr.bf16.mxu0 0
    %252 = vmatpush1.bf16.msra.mxu0 %v227
    %253 = vmatprep.subr.bf16.mxu0 0
    %254 = vmatpush1.bf16.msra.mxu0 %v226
    %255 = vmatprep.subr.bf16.mxu0 0
    %256 = vmatpush1.bf16.msra.mxu0 %v225
    %257 = vmatprep.subr.bf16.mxu0 0
    %258 = vmatpush2.bf16.msra.mxu0 0
    %259 = vmatprep.subr.bf16.mxu0 0
    %260 = vmatpush2.bf16.msra.mxu0 0
    %261 = vmatprep.subr.bf16.mxu0 0
    %262 = vmatpush2.bf16.msra.mxu0 0
    %263 = vmatprep.subr.bf16.mxu0 0
    %264 = vmatpush2.bf16.msra.mxu0 0
    %265 = vmatprep.subr.bf16.mxu0 0
    %266 = vmatpush2.bf16.msra.mxu0 0
    %267 = vmatprep.subr.bf16.mxu0 0
    %268 = vmatpush2.bf16.msra.mxu0 0
    %269 = vmatprep.subr.bf16.mxu0 0
    %270 = vmatpush2.bf16.msra.mxu0 0
    %271 = vmatprep.subr.bf16.mxu0 0
    %272 = vmatpush2.bf16.msra.mxu0 0
    %273 = vmatprep.mubr.bf16.mxu0 0
    %274 = vmatmul.mubr.bf16.gmra.mxu0 %v176
    %v275 = vpop.f32.mrf.mxu0
    %v276 = vadd.f32 0.0, %v275
    %v277 = vpop.f32.mrf.mxu0
    %v278 = vpop.f32.mrf.mxu0
    %v279 = vpop.f32.mrf.mxu0
    %280 = vdwg.mxu0
    %v281 = vadd.f32 %v175, %v276
    %282 = vst [vmem:[#allocation2] sm:$0xff] %v281
    // Predicated region
    $region26: #{predictor_forward.1} parent=1 // pred_check
      %p283 = pneg %p22
    $region27: #{predictor_forward.1} parent=1 // pred_check_branch
      %285 = sbr.rel (%p283) target = $region29
    $region28: #{predictor_forward.1} parent=1 // pred_region
      %v286 = vld [vmem:[#allocation2] sm:$0xff]
      %287 = vst [vmem:[#allocation3] sm:$0xff] %v286
    $region29: #{predictor_forward.1} parent=1 // pred_fallthru
      _
    // Predicated region
    $region30: #{predictor_forward.1} parent=1 // pred_check
      _
    $region31: #{predictor_forward.1} parent=1 // pred_check_branch
      %289 = sbr.rel (0) target = $region33
    $region32: #{predictor_forward.1} parent=1 // pred_region
      %s291 = ssub.s32 128, 128
      %292 = vsyncadd [#allocation4], %s291
      %s294 = sshll.u32 [#allocation3], 4
      %s295 = int_to_ptr.vmem [resolvable:$true] %s294
      %297 = dma.vmem_to_hbm [thread:$0]  %s295, 128, %s5, [#allocation4]
    $region33: #{predictor_forward.1} parent=1 // pred_fallthru
      _
    // Predicated region
    $region34: #{predictor_forward.1} parent=1 // pred_check
      _
    $region35: #{predictor_forward.1} parent=1 // pred_check_branch
      %299 = sbr.rel (0) target = $region37
    $region36: #{predictor_forward.1} parent=1 // pred_region
      %300 = dma.done [#allocation4], 128
    $region37: #{predictor_forward.1} parent=1 // pred_fallthru
      _
    %301 = vsyncpa [#allocation4], 1

</llo_original>
